<compile_context>
chip_gen: v7x
topology: tpu7x:2x2x1
jax: 0.10.0
libtpu: 0.0.40
codegen_flags: <defaults>
</compile_context>

<pallas_src>
import functools
import math

import jax
import jax.numpy as jnp
from jax.experimental import pallas as pl
from jax.experimental.pallas import tpu as pltpu


# ---------------------------------------------------------------------------
# activations (exact match to the PyTorch reference implementations)
# ---------------------------------------------------------------------------
_INV_SQRT2 = 1.0 / math.sqrt(2.0)


def _gelu(x):
    # x * 0.5 * (1 + erf(x / sqrt(2)))  -- erf lowers to the EUP (transcendental unit).
    return x * 0.5 * (1.0 + jax.lax.erf(x * _INV_SQRT2))


def _relu(x):
    return jnp.maximum(x, 0.0)


def _swish(x):
    return x * jax.nn.sigmoid(x)


_ACT2FN = {"gelu": _gelu, "relu": _relu, "swish": _swish}


# ---------------------------------------------------------------------------
# kernel
# ---------------------------------------------------------------------------
def _cross_intermediate_kernel(x_ref, w_ref, b_ref, o_ref, acc_ref, *, act_fn):
    k = pl.program_id(2)

    @pl.when(k == 0)
    def _():
        acc_ref[...] = jnp.zeros_like(acc_ref)

    # MXU consumes native-dtype tiles; accumulate in f32.
    acc_ref[...] += jnp.dot(
        x_ref[...], w_ref[...], preferred_element_type=jnp.float32
    )

    @pl.when(k == pl.num_programs(2) - 1)
    def _():
        y = acc_ref[...] + b_ref[...].astype(jnp.float32)   # (TM,TN) + (1,TN)
        o_ref[...] = act_fn(y).astype(o_ref.dtype)


def _pick_tile(dim, target, align):
    """Largest tile <= target that divides dim and is a multiple of `align`
    (falls back to the full dim, which always satisfies the layout rule)."""
    if dim <= target:
        return dim
    t = (target // align) * align
    while t >= align:
        if dim % t == 0:
            return t
        t -= align
    return dim


# ---------------------------------------------------------------------------
# wrapper
# ---------------------------------------------------------------------------
def cross_intermediate(hidden_states, weight, bias, *, hidden_act="gelu",
                       tm=256, tn=512, tk=512):
    """hidden_states: (B, S, H); weight: (H, I); bias: (I,)  ->  (B, S, I)."""
    B, S, H = hidden_states.shape
    I = weight.shape[1]
    M = B * S

    x2 = hidden_states.reshape(M, H)          # rows on sublanes, hidden on lanes
    b2 = bias.reshape(1, I)

    TM = _pick_tile(M, tm, 8)
    TN = _pick_tile(I, tn, 128)
    TK = _pick_tile(H, tk, 128)

    kernel = functools.partial(_cross_intermediate_kernel,
                               act_fn=_ACT2FN[hidden_act])

    flops = 2.0 * M * I * H
    bytes_accessed = (x2.size * x2.dtype.itemsize
                      + weight.size * weight.dtype.itemsize
                      + b2.size * b2.dtype.itemsize
                      + M * I * hidden_states.dtype.itemsize)

    out2 = pl.pallas_call(
        kernel,
        out_shape=jax.ShapeDtypeStruct((M, I), hidden_states.dtype),
        grid_spec=pltpu.PrefetchScalarGridSpec(
            num_scalar_prefetch=0,
            grid=(M // TM, I // TN, H // TK),
            in_specs=[
                pl.BlockSpec((TM, TK), lambda i, j, k: (i, k)),   # x tile
                pl.BlockSpec((TK, TN), lambda i, j, k: (k, j)),   # W tile
                pl.BlockSpec((1, TN), lambda i, j, k: (0, j)),    # bias tile (resident per N)
            ],
            out_specs=pl.BlockSpec((TM, TN), lambda i, j, k: (i, j)),
            scratch_shapes=[pltpu.VMEM((TM, TN), jnp.float32)],
        ),
        compiler_params=pltpu.CompilerParams(
            dimension_semantics=("parallel", "parallel", "arbitrary"),
            vmem_limit_bytes=64 * 1024 * 1024,
        ),
        cost_estimate=pl.CostEstimate(
            flops=int(flops),
            transcendentals=int(M * I),
            bytes_accessed=int(bytes_accessed),
        ),
    )(x2, weight, b2)

    return out2.reshape(B, S, I)


# ---------------------------------------------------------------------------
# params / reference
# ---------------------------------------------------------------------------
def init_params(key, hidden_size, intermediate_size):
    k_w, k_b = jax.random.split(key)
    bound = 1.0 / math.sqrt(hidden_size)
    return {
        "dense_weight": jax.random.uniform(
            k_w, (hidden_size, intermediate_size), jnp.float32, -bound, bound),
        "dense_bias": jax.random.uniform(
            k_b, (intermediate_size,), jnp.float32, -bound, bound),
    }


def reference(hidden_states, params, hidden_act="gelu"):
    y = jnp.einsum("bsh,hi->bsi", hidden_states, params["dense_weight"])
    y = y + params["dense_bias"]
    return _ACT2FN[hidden_act](y)


if __name__ == "__main__":
    B, S = 2, 8
    hidden_size, intermediate_size = 32, 128

    key = jax.random.PRNGKey(0)
    k_x, k_p = jax.random.split(key)
    hidden_states = jax.random.normal(k_x, (B, S, hidden_size), jnp.float32)
    params = init_params(k_p, hidden_size, intermediate_size)

    out = cross_intermediate(hidden_states, params["dense_weight"],
                             params["dense_bias"], hidden_act="gelu")
    out = jax.block_until_ready(out)

    ref = reference(hidden_states, params, "gelu")
    assert out.shape == (B, S, intermediate_size)
    assert jnp.allclose(out, ref, atol=1e-5, rtol=1e-5), "mismatch vs reference"
    print("KERNEL_OK")
</pallas_src>

<mosaic_0001>
module attributes {stable_mosaic.version = 11 : i64} {
  func.func @_cross_intermediate_kernel(%arg0: i32, %arg1: i32, %arg2: i32, %arg3: memref<16x32xf32, #tpu.memory_space<vmem>>, %arg4: memref<32x128xf32, #tpu.memory_space<vmem>>, %arg5: memref<1x128xf32, #tpu.memory_space<vmem>>, %arg6: memref<16x128xf32, #tpu.memory_space<vmem>>, %arg7: memref<16x128xf32, #tpu.memory_space<vmem>>) attributes {dimension_semantics = [#tpu.dimension_semantics<parallel>, #tpu.dimension_semantics<parallel>, #tpu.dimension_semantics<arbitrary>], iteration_bounds = array<i64: 1, 1, 1>, scalar_prefetch = 0 : i64, scratch_operands = 1 : i64, tpu.core_type = #tpu.core_type<tc>, window_params = [{transform_indices = @transform_0, window_bounds = array<i64: 16, 32>}, {transform_indices = @transform_1, window_bounds = array<i64: 32, 128>}, {transform_indices = @transform_2, window_bounds = array<i64: 1, 128>}, {transform_indices = @transform_3, window_bounds = array<i64: 16, 128>}]} {
    %c0_i32 = arith.constant 0 : i32
    %0 = arith.cmpi eq, %arg2, %c0_i32 : i32
    %1 = arith.extui %0 : i1 to i32
    %c0_i32_0 = arith.constant 0 : i32
    %2 = arith.cmpi ne, %1, %c0_i32_0 : i32
    scf.if %2 {
      %cst_10 = arith.constant 0.000000e+00 : f32
      %12 = vector.broadcast %cst_10 : f32 to vector<16x128xf32>
      %c0_11 = arith.constant 0 : index
      %c0_12 = arith.constant 0 : index
      %13 = vector.load %arg7[%c0_11, %c0_12] : memref<16x128xf32, #tpu.memory_space<vmem>>, vector<16x128xf32>
      tpu.vector_store %arg7[%c0_11, %c0_12], %12 {strides = array<i32>} : memref<16x128xf32, #tpu.memory_space<vmem>>, vector<16x128xf32>,
    } else {
    }
    %c0 = arith.constant 0 : index
    %c0_1 = arith.constant 0 : index
    %3 = vector.load %arg7[%c0, %c0_1] : memref<16x128xf32, #tpu.memory_space<vmem>>, vector<16x128xf32>
    %c0_2 = arith.constant 0 : index
    %c0_3 = arith.constant 0 : index
    %4 = vector.load %arg3[%c0_2, %c0_3] : memref<16x32xf32, #tpu.memory_space<vmem>>, vector<16x32xf32>
    %c0_4 = arith.constant 0 : index
    %c0_5 = arith.constant 0 : index
    %5 = vector.load %arg4[%c0_4, %c0_5] : memref<32x128xf32, #tpu.memory_space<vmem>>, vector<32x128xf32>
    %cst = arith.constant dense<0.000000e+00> : vector<16x128xf32>
    %6 = tpu.matmul %4, %5, %cst {dimension_numbers = #tpu.dot_dimension_numbers<[1], [0], [0], [1], [0, 0, 1, 1], [], []>} : vector<16x32xf32>, vector<32x128xf32>, vector<16x128xf32> -> vector<16x128xf32>
    %7 = arith.addf %3, %6 : vector<16x128xf32>
    %c0_6 = arith.constant 0 : index
    %c0_7 = arith.constant 0 : index
    %8 = vector.load %arg7[%c0_6, %c0_7] : memref<16x128xf32, #tpu.memory_space<vmem>>, vector<16x128xf32>
    tpu.vector_store %arg7[%c0_6, %c0_7], %7 {strides = array<i32>} : memref<16x128xf32, #tpu.memory_space<vmem>>, vector<16x128xf32>,
    %c0_i32_8 = arith.constant 0 : i32
    %9 = arith.cmpi eq, %arg2, %c0_i32_8 : i32
    %10 = arith.extui %9 : i1 to i32
    %c0_i32_9 = arith.constant 0 : i32
    %11 = arith.cmpi ne, %10, %c0_i32_9 : i32
    scf.if %11 {
      %c0_10 = arith.constant 0 : index
      %c0_11 = arith.constant 0 : index
      %12 = vector.load %arg7[%c0_10, %c0_11] : memref<16x128xf32, #tpu.memory_space<vmem>>, vector<16x128xf32>
      %c0_12 = arith.constant 0 : index
      %c0_13 = arith.constant 0 : index
      %13 = vector.load %arg5[%c0_12, %c0_13] : memref<1x128xf32, #tpu.memory_space<vmem>>, vector<1x128xf32>
      %14 = vector.broadcast %13 : vector<1x128xf32> to vector<16x128xf32>
      %15 = arith.addf %12, %14 : vector<16x128xf32>
      %cst_14 = arith.constant 5.000000e-01 : f32
      %16 = vector.broadcast %cst_14 : f32 to vector<16x128xf32>
      %17 = arith.mulf %15, %16 : vector<16x128xf32>
      %cst_15 = arith.constant 0.707106769 : f32
      %18 = vector.broadcast %cst_15 : f32 to vector<16x128xf32>
      %19 = arith.mulf %15, %18 : vector<16x128xf32>
      %20 = math.erf %19 : vector<16x128xf32>
      %cst_16 = arith.constant 1.000000e+00 : f32
      %21 = vector.broadcast %cst_16 : f32 to vector<16x128xf32>
      %22 = arith.addf %21, %20 : vector<16x128xf32>
      %23 = arith.mulf %17, %22 : vector<16x128xf32>
      %c0_17 = arith.constant 0 : index
      %c0_18 = arith.constant 0 : index
      %24 = vector.load %arg6[%c0_17, %c0_18] : memref<16x128xf32, #tpu.memory_space<vmem>>, vector<16x128xf32>
      tpu.vector_store %arg6[%c0_17, %c0_18], %23 {strides = array<i32>} : memref<16x128xf32, #tpu.memory_space<vmem>>, vector<16x128xf32>,
    } else {
    }
    return
  }
  func.func @transform_0(%arg0: i32, %arg1: i32, %arg2: i32) -> (i32, i32) {
    %c0_i32 = arith.constant 0 : i32
    return %arg0, %arg2 : i32, i32
  }
  func.func @transform_1(%arg0: i32, %arg1: i32, %arg2: i32) -> (i32, i32) {
    %c0_i32 = arith.constant 0 : i32
    return %arg2, %arg1 : i32, i32
  }
  func.func @transform_2(%arg0: i32, %arg1: i32, %arg2: i32) -> (i32, i32) {
    %c0_i32 = arith.constant 0 : i32
    %c0_i32_0 = arith.constant 0 : i32
    return %c0_i32, %arg1 : i32, i32
  }
  func.func @transform_3(%arg0: i32, %arg1: i32, %arg2: i32) -> (i32, i32) {
    %c0_i32 = arith.constant 0 : i32
    return %arg0, %arg1 : i32, i32
  }
}

</mosaic_0001>

<llo_original>
// kernel: tpu_custom_call.1
$region0: #{tpu_custom_call.1}
  #allocation0 [shape = 'u32[]', space=smem, size = 0x4, offset = 0x4, fixed_abs, tag = 'smem constant byte address 0x4 - core index']
  #allocation1 [shape = 'u32[144,128]{1,0:T(1,128)}', space=vmem, size = 0x12000, scoped, tag = 'internal scratch']
  #allocation2 [shape = 'f32[16,128]{1,0:T(8,128)}', space=vmem, size = 0x2000, scoped, tag = 'scratch operand']
  %s0 = inlined_call_operand.hbm [shape: f32[16,32], index: 0, kind: input, shape index: {}]
  %s1 = inlined_call_operand.hbm [shape: f32[32,128], index: 1, kind: input, shape index: {}]
  %s2 = inlined_call_operand.hbm [shape: f32[1,128], index: 2, kind: input, shape index: {}]
  %s3 = inlined_call_operand.hbm [shape: f32[16,128], index: 3, kind: output, shape index: {}]
  %s4 = sld [smem:[#allocation0]]
  $region42: #{tpu_custom_call.1} parent=0
    _
  %s6 = ssub.s32 1, %s4
  %s7 = scalar_select 0, %s6, %s4
  $region1: #{tpu_custom_call.1} parent=0
    #allocation3 [shape = 'u8[8192]{0}', space=vmem, size = 0x2000, scoped, tag = 'input window, operand 0, single buffered']
    #allocation4 [shape = 's32[1]{0}', space=sflag, size = 0x4, scoped, tag = 'scoped memory for tpu_custom_call.1']
    #allocation5 [shape = 's32[1]{0}', space=sflag, size = 0x4, scoped, tag = 'scoped memory for tpu_custom_call.1']
    #allocation6 [shape = 'u8[16384]{0}', space=vmem, size = 0x4000, scoped, tag = 'input window, operand 1, single buffered']
    #allocation7 [shape = 's32[1]{0}', space=sflag, size = 0x4, scoped, tag = 'scoped memory for tpu_custom_call.1']
    #allocation8 [shape = 'u8[512]{0}', space=vmem, size = 0x400, scoped, tag = 'input window, operand 2, single buffered']
    #allocation9 [shape = 'u8[8192]{0}', space=vmem, size = 0x2000, scoped, tag = 'output window, operand 0, single buffered']
    %8 = vsyncpa [#allocation4], 0
    %9 = vsyncpa [#allocation7], 0
    %10 = vsyncpa [#allocation5], 0
    // Predicated region
    $region2: #{tpu_custom_call.1} parent=1 // pred_check
      _
    $region3: #{tpu_custom_call.1} parent=1 // pred_check_branch
      %12 = sbr.rel (0) target = $region5
    $region4: #{tpu_custom_call.1} parent=1 // pred_region
      %s14 = ssub.s32 256, 256
      %15 = vsyncadd [#allocation4], %s14
      %s16 = sshll.u32 [#allocation3], 4
      %s17 = int_to_ptr.vmem [resolvable:$true] %s16
      %22 = dma.hbm_to_vmem [thread:$0]  %s0, 256, %s17, [#allocation4], 128, 128, 8
    $region5: #{tpu_custom_call.1} parent=1 // pred_fallthru
      _
    // Predicated region
    $region6: #{tpu_custom_call.1} parent=1 // pred_check
      _
    $region7: #{tpu_custom_call.1} parent=1 // pred_check_branch
      %24 = sbr.rel (0) target = $region9
    $region8: #{tpu_custom_call.1} parent=1 // pred_region
      %s26 = ssub.s32 512, 512
      %27 = vsyncadd [#allocation7], %s26
      %s28 = sshll.u32 [#allocation6], 4
      %s29 = int_to_ptr.vmem [resolvable:$true] %s28
      %34 = dma.hbm_to_vmem [thread:$0]  %s1, 512, %s29, [#allocation7], 128, 128, 8
    $region9: #{tpu_custom_call.1} parent=1 // pred_fallthru
      _
    // Predicated region
    $region10: #{tpu_custom_call.1} parent=1 // pred_check
      _
    $region11: #{tpu_custom_call.1} parent=1 // pred_check_branch
      %36 = sbr.rel (0) target = $region13
    $region12: #{tpu_custom_call.1} parent=1 // pred_region
      %s38 = ssub.s32 16, 16
      %39 = vsyncadd [#allocation7], %s38
      %s41 = sshll.u32 [#allocation8], 4
      %s42 = int_to_ptr.vmem [resolvable:$true] %s41
      %44 = dma.hbm_to_vmem [thread:$0]  %s2, 16, %s42, [#allocation7]
    $region13: #{tpu_custom_call.1} parent=1 // pred_fallthru
      _
    // Predicated region
    $region14: #{tpu_custom_call.1} parent=1 // pred_check
      _
    $region15: #{tpu_custom_call.1} parent=1 // pred_check_branch
      %46 = sbr.rel (0) target = $region17
    $region16: #{tpu_custom_call.1} parent=1 // pred_region
      %47 = dma.done [#allocation4], 256
    $region17: #{tpu_custom_call.1} parent=1 // pred_fallthru
      _
    // Predicated region
    $region18: #{tpu_custom_call.1} parent=1 // pred_check
      _
    $region19: #{tpu_custom_call.1} parent=1 // pred_check_branch
      %49 = sbr.rel (0) target = $region21
    $region20: #{tpu_custom_call.1} parent=1 // pred_region
      %50 = dma.done [#allocation7], 512
    $region21: #{tpu_custom_call.1} parent=1 // pred_fallthru
      _
    // Predicated region
    $region22: #{tpu_custom_call.1} parent=1 // pred_check
      _
    $region23: #{tpu_custom_call.1} parent=1 // pred_check_branch
      %52 = sbr.rel (0) target = $region25
    $region24: #{tpu_custom_call.1} parent=1 // pred_region
      %53 = dma.done [#allocation7], 16
    $region25: #{tpu_custom_call.1} parent=1 // pred_fallthru
      _
    %p54 = scmp.eq.s32.totalorder 0, 0
    // Predicated region
    $region26: #{tpu_custom_call.1} parent=1 // pred_check
      %p55 = pneg %p54
    $region27: #{tpu_custom_call.1} parent=1 // pred_check_branch
      %57 = sbr.rel (%p55) target = $region29
    $region28: #{tpu_custom_call.1} parent=1 // pred_region
      %58 = vst [vmem:[#allocation2] sm:$0xff] 0.0
      %59 = vst [vmem:[#allocation2 + $0x8] sm:$0xff] 0.0
    $region29: #{tpu_custom_call.1} parent=1 // pred_fallthru
      _
    %v60 = vld [vmem:[#allocation2] sm:$0xff]
    %v61 = vld [vmem:[#allocation2 + $0x8] sm:$0xff]
    %v62 = vld [vmem:[#allocation3] sm:$0xff]
    %v63 = vld [vmem:[#allocation3 + $0x8] sm:$0xff]
    %v64 = vld [vmem:[#allocation6] sm:$0xff]
    %v65 = vld [vmem:[#allocation6 + $0x8] sm:$0xff]
    %v66 = vld [vmem:[#allocation6 + $0x10] sm:$0xff]
    %v67 = vld [vmem:[#allocation6 + $0x18] sm:$0xff]
    %vm68 = vcmask 261120
    %v70 = vsel %vm68, %v62, 0
    %v73 = vsel %vm68, %v63, 0
    %75 = vmatprep.subr.mxu0 0.0
    %76 = vmatpush1.msra.mxu0 %v64
    %77 = vmatprep.subr.mxu0 0.0
    %78 = vmatpush1.msra.mxu0 %v65
    %79 = vmatprep.subr.mxu0 0.0
    %80 = vmatpush1.msra.mxu0 %v66
    %81 = vmatprep.subr.mxu0 0.0
    %82 = vmatpush1.msra.mxu0 %v67
    %83 = vmatprep.subr.mxu0 0.0
    %84 = vmatpush1.msra.mxu0 0.0
    %85 = vmatprep.subr.mxu0 0.0
    %86 = vmatpush1.msra.mxu0 0.0
    %87 = vmatprep.subr.mxu0 0.0
    %88 = vmatpush1.msra.mxu0 0.0
    %89 = vmatprep.subr.mxu0 0.0
    %90 = vmatpush1.msra.mxu0 0.0
    %91 = vmatprep.subr.mxu0 0.0
    %92 = vmatpush1.msra.mxu0 0.0
    %93 = vmatprep.subr.mxu0 0.0
    %94 = vmatpush1.msra.mxu0 0.0
    %95 = vmatprep.subr.mxu0 0.0
    %96 = vmatpush1.msra.mxu0 0.0
    %97 = vmatprep.subr.mxu0 0.0
    %98 = vmatpush1.msra.mxu0 0.0
    %99 = vmatprep.subr.mxu0 0.0
    %100 = vmatpush1.msra.mxu0 0.0
    %101 = vmatprep.subr.mxu0 0.0
    %102 = vmatpush1.msra.mxu0 0.0
    %103 = vmatprep.subr.mxu0 0.0
    %104 = vmatpush1.msra.mxu0 0.0
    %105 = vmatprep.subr.mxu0 0.0
    %106 = vmatpush1.msra.mxu0 0.0
    %107 = vmatprep.subr.mxu0 0.0
    %108 = vmatpush1.msra.mxu0 0.0
    %109 = vmatprep.subr.mxu0 0.0
    %110 = vmatpush1.msra.mxu0 0.0
    %111 = vmatprep.subr.mxu0 0.0
    %112 = vmatpush1.msra.mxu0 0.0
    %113 = vmatprep.subr.mxu0 0.0
    %114 = vmatpush1.msra.mxu0 0.0
    %115 = vmatprep.subr.mxu0 0.0
    %116 = vmatpush1.msra.mxu0 0.0
    %117 = vmatprep.subr.mxu0 0.0
    %118 = vmatpush1.msra.mxu0 0.0
    %119 = vmatprep.subr.mxu0 0.0
    %120 = vmatpush1.msra.mxu0 0.0
    %121 = vmatprep.subr.mxu0 0.0
    %122 = vmatpush1.msra.mxu0 0.0
    %123 = vmatprep.subr.mxu0 0.0
    %124 = vmatpush1.msra.mxu0 0.0
    %125 = vmatprep.subr.mxu0 0.0
    %126 = vmatpush1.msra.mxu0 0.0
    %127 = vmatprep.subr.mxu0 0.0
    %128 = vmatpush1.msra.mxu0 0.0
    %129 = vmatprep.subr.mxu0 0.0
    %130 = vmatpush1.msra.mxu0 0.0
    %131 = vmatprep.subr.mxu0 0.0
    %132 = vmatpush1.msra.mxu0 0.0
    %133 = vmatprep.subr.mxu0 0.0
    %134 = vmatpush1.msra.mxu0 0.0
    %135 = vmatprep.subr.mxu0 0.0
    %136 = vmatpush1.msra.mxu0 0.0
    %137 = vmatprep.subr.mxu0 0.0
    %138 = vmatpush1.msra.mxu0 0.0
    %139 = vmatprep.mubr.f32.mxu0 0.0
    %140 = vmatmul.mubr.f32.gmra.mrb[0].mxu0 %v70
    %v141 = vpop.f32.mrb[0].mxu0
    %v142 = vadd.f32 0.0, %v141
    %v143 = vpop.f32.mrb[0].mxu0
    %144 = vmatprep.mubr.f32.mxu0 0.0
    %145 = vmatmul.mubr.f32.gmra.mrb[0].mxu0 %v73
    %v146 = vpop.f32.mrb[0].mxu0
    %v147 = vadd.f32 0.0, %v146
    %v148 = vpop.f32.mrb[0].mxu0
    %149 = vdwg.mxu0
    %v150 = vadd.f32 %v60, %v142
    %v151 = vadd.f32 %v61, %v147
    %152 = vst [vmem:[#allocation2] sm:$0xff] %v150
    %153 = vst [vmem:[#allocation2 + $0x8] sm:$0xff] %v151
    // Predicated region
    $region30: #{tpu_custom_call.1} parent=1 // pred_check
      %p154 = pneg %p54
    $region31: #{tpu_custom_call.1} parent=1 // pred_check_branch
      %156 = sbr.rel (%p154) target = $region33
    $region32: #{tpu_custom_call.1} parent=1 // pred_region
      %v157 = vld [vmem:[#allocation2] sm:$0xff]
      %v158 = vld [vmem:[#allocation2 + $0x8] sm:$0xff]
      %v159 = vld [vmem:[#allocation8] sm:$0x1]
      %v161 = vlaneseq
      %v162 = vshrl.u32 %v161, 7
      %v163 = vsub.s32 0, %v162
      %v164 = vrot.slane %v159, %v163
      %v166 = vadd.f32 %v157, %v164
      %v167 = vadd.f32 %v158, %v164
      %v168 = vmul.f32 %v166, 0.5
      %v169 = vmul.f32 %v167, 0.5
      %v170 = vmul.f32 %v166, 0.70710677
      %v171 = vmul.f32 %v167, 0.70710677
      %v172 = verf.f32.pop %v170
      %v173 = verf.f32.pop %v171
      %v174 = vadd.f32 %v172, 1.0
      %v175 = vadd.f32 %v173, 1.0
      %v176 = vmul.f32 %v168, %v174
      %v177 = vmul.f32 %v169, %v175
      %178 = vst [vmem:[#allocation9] sm:$0xff] %v176
      %179 = vst [vmem:[#allocation9 + $0x8] sm:$0xff] %v177
    $region33: #{tpu_custom_call.1} parent=1 // pred_fallthru
      _
    // Predicated region
    $region34: #{tpu_custom_call.1} parent=1 // pred_check
      _
    $region35: #{tpu_custom_call.1} parent=1 // pred_check_branch
      %181 = sbr.rel (0) target = $region37
    $region36: #{tpu_custom_call.1} parent=1 // pred_region
      %s183 = ssub.s32 256, 256
      %184 = vsyncadd [#allocation5], %s183
      %s185 = sshll.u32 [#allocation9], 4
      %s186 = int_to_ptr.vmem [resolvable:$true] %s185
      %191 = dma.vmem_to_hbm [thread:$0]  %s186, 256, %s3, [#allocation5], 128, 128, 8
    $region37: #{tpu_custom_call.1} parent=1 // pred_fallthru
      _
    // Predicated region
    $region38: #{tpu_custom_call.1} parent=1 // pred_check
      _
    $region39: #{tpu_custom_call.1} parent=1 // pred_check_branch
      %193 = sbr.rel (0) target = $region41
    $region40: #{tpu_custom_call.1} parent=1 // pred_region
      %194 = dma.done [#allocation5], 256
    $region41: #{tpu_custom_call.1} parent=1 // pred_fallthru
      _
    %195 = vsyncpa [#allocation4], 1
    %196 = vsyncpa [#allocation7], 1
    %197 = vsyncpa [#allocation5], 1

</llo_original>
